<compile_context>
chip_gen: v7x
topology: tpu7x:2x2x1
jax: 0.10.0
libtpu: 0.0.40
codegen_flags: <defaults>
</compile_context>

<pallas_src>
import math

import jax
import jax.numpy as jnp
from jax.experimental import pallas as pl
from jax.experimental.pallas import tpu as pltpu  # noqa: F401  (TPU backend)


def _ddqn_kernel(obs_ref, advb_ref, coeff_ref,
                 wc1_ref, bc1_ref, wc2_ref, bc2_ref,
                 wc3_ref, bc3_ref, wc4_ref, bc4_ref,
                 wa1_ref, ba1_ref, wa2_ref, ba2_ref,
                 wa3_ref, ba3_ref, wa4_ref, ba4_ref,
                 out_ref):
    f32 = jnp.float32

    def leaky_relu(v):  # LeakyReLU(0.2)
        return jnp.where(v > 0, v, 0.2 * v)

    # --- critic (ModelDeepObjective) on the observation row (1, dim_obs) ---
    h = obs_ref[...]
    h = leaky_relu(jnp.dot(h, wc1_ref[...], preferred_element_type=f32) + bc1_ref[...])
    h = leaky_relu(jnp.dot(h, wc2_ref[...], preferred_element_type=f32) + bc2_ref[...])
    h = leaky_relu(jnp.dot(h, wc3_ref[...], preferred_element_type=f32) + bc3_ref[...])
    objective = jnp.dot(h, wc4_ref[...], preferred_element_type=f32) + bc4_ref[...]   # (1, 1)

    # --- advantage (ModelDDQNAdvantage) on the batched rows:
    #     row 0 = observation_action, rows 1.. = concat(observation, actions_grid[:, j]) ---
    g = advb_ref[...]                                                                 # (1+n_grid, D)
    g = jnp.maximum(jnp.dot(g, wa1_ref[...], preferred_element_type=f32) + ba1_ref[...], 0.0)
    g = jnp.maximum(jnp.dot(g, wa2_ref[...], preferred_element_type=f32) + ba2_ref[...], 0.0)
    g = jnp.maximum(jnp.dot(g, wa3_ref[...], preferred_element_type=f32) + ba3_ref[...], 0.0)
    adv = jnp.dot(g, wa4_ref[...], preferred_element_type=f32) + ba4_ref[...]         # (1+n_grid, 1)

    # objective + advantage - sum_j advantage_j / len(actions_grid),
    # folded into a single weighted reduction via the precomputed coeff column.
    out_ref[...] = objective + jnp.sum(adv * coeff_ref[...])


def model_ddqn_forward(input_tensor, params, actions_grid, *, dim_observation):
    """Pallas-backed equivalent of ModelDDQN.forward for a single 1-D input."""
    x = jnp.asarray(input_tensor, jnp.float32)              # (dim_obs + dim_act,)
    actions_grid = jnp.asarray(actions_grid, jnp.float32)   # (dim_act, n_grid)
    dim_action, n_grid = actions_grid.shape

    obs = x[:dim_observation]                                # (dim_obs,)
    obs_row = obs[None, :]                                   # (1, dim_obs)

    # Advantage batch: row 0 is the real observation_action; rows 1.. are
    # observation ++ actions_grid column j (built in the wrapper -> no in-kernel
    # slicing/concat relayouts).
    grid_rows = jnp.concatenate(
        [jnp.broadcast_to(obs, (n_grid, dim_observation)), actions_grid.T], axis=1)
    adv_batch = jnp.concatenate([x[None, :], grid_rows], axis=0)        # (1+n_grid, D)

    # Combination coefficients: +1 for the real row, -1/len(actions_grid) for grid rows
    # (len(actions_grid) == dim_action, exactly as in the original torch code).
    coeff = jnp.concatenate(
        [jnp.ones((1, 1), jnp.float32),
         jnp.full((n_grid, 1), -1.0 / float(dim_action), jnp.float32)], axis=0)

    inputs = (
        obs_row, adv_batch, coeff,
        params["wc1"], params["bc1"], params["wc2"], params["bc2"],
        params["wc3"], params["bc3"], params["wc4"], params["bc4"],
        params["wa1"], params["ba1"], params["wa2"], params["ba2"],
        params["wa3"], params["ba3"], params["wa4"], params["ba4"],
    )

    dim_hidden = params["wc1"].shape[1]
    dim_in_adv = params["wa1"].shape[0]
    n_rows = 1 + n_grid
    flops = (2 * (dim_observation * dim_hidden + 2 * dim_hidden * dim_hidden + dim_hidden)
             + 2 * n_rows * (dim_in_adv * dim_hidden + 2 * dim_hidden * dim_hidden + dim_hidden))
    bytes_accessed = sum(int(a.size) for a in inputs) * 4 + 4

    out = pl.pallas_call(
        _ddqn_kernel,
        out_shape=jax.ShapeDtypeStruct((1, 1), jnp.float32),
        in_specs=[pl.BlockSpec(a.shape, lambda: (0, 0)) for a in inputs],
        out_specs=pl.BlockSpec((1, 1), lambda: (0, 0)),
        cost_estimate=pl.CostEstimate(flops=flops, transcendentals=0,
                                      bytes_accessed=bytes_accessed),
    )(*inputs)

    return out[0, 0]                                          # scalar, like torch.squeeze


def _reference_forward(input_tensor, params, actions_grid, *, dim_observation):
    """Pure-JAX reference mirroring the torch module structure (loop over grid items)."""
    x = jnp.asarray(input_tensor, jnp.float32)
    actions_grid = jnp.asarray(actions_grid, jnp.float32)
    obs = x[:dim_observation]

    def leaky(v):
        return jnp.where(v > 0, v, 0.2 * v)

    def critic(v):
        h = leaky(v @ params["wc1"] + params["bc1"][0])
        h = leaky(h @ params["wc2"] + params["bc2"][0])
        h = leaky(h @ params["wc3"] + params["bc3"][0])
        return (h @ params["wc4"] + params["bc4"][0])[0]

    def advantage(v):
        h = jnp.maximum(v @ params["wa1"] + params["ba1"][0], 0.0)
        h = jnp.maximum(h @ params["wa2"] + params["ba2"][0], 0.0)
        h = jnp.maximum(h @ params["wa3"] + params["ba3"][0], 0.0)
        return (h @ params["wa4"] + params["ba4"][0])[0]

    objective = critic(obs)
    adv = advantage(x)
    grid_sum = 0.0
    for j in range(actions_grid.shape[1]):
        grid_sum = grid_sum + advantage(jnp.concatenate([obs, actions_grid[:, j]]))
    adv_grid_mean = grid_sum / actions_grid.shape[0]          # len(actions_grid) == dim_action
    return objective + (adv - adv_grid_mean)


if __name__ == "__main__":
    # Small shapes consistent with the module.
    dim_observation = 5
    dim_action = 2
    dim_hidden = 40
    n_grid = 9

    key = jax.random.PRNGKey(0)
    keys = jax.random.split(key, 18)

    def linear_params(kw, kb, fan_in, fan_out):
        # nn.Linear-style uniform init; weight stored pre-transposed as (in, out).
        bound = 1.0 / math.sqrt(fan_in)
        w = jax.random.uniform(kw, (fan_in, fan_out), minval=-bound, maxval=bound,
                               dtype=jnp.float32)
        b = jax.random.uniform(kb, (1, fan_out), minval=-bound, maxval=bound,
                               dtype=jnp.float32)
        return w, b

    params = {}
    # critic (ModelDeepObjective): dim_obs -> 40 -> 40 -> 40 -> 1
    params["wc1"], params["bc1"] = linear_params(keys[0], keys[1], dim_observation, dim_hidden)
    params["wc2"], params["bc2"] = linear_params(keys[2], keys[3], dim_hidden, dim_hidden)
    params["wc3"], params["bc3"] = linear_params(keys[4], keys[5], dim_hidden, dim_hidden)
    params["wc4"], params["bc4"] = linear_params(keys[6], keys[7], dim_hidden, 1)
    # advantage (ModelDDQNAdvantage): dim_obs+dim_act -> 40 -> 40 -> 40 -> 1
    params["wa1"], params["ba1"] = linear_params(keys[8], keys[9], dim_observation + dim_action, dim_hidden)
    params["wa2"], params["ba2"] = linear_params(keys[10], keys[11], dim_hidden, dim_hidden)
    params["wa3"], params["ba3"] = linear_params(keys[12], keys[13], dim_hidden, dim_hidden)
    params["wa4"], params["ba4"] = linear_params(keys[14], keys[15], dim_hidden, 1)

    # actions_grid: (dim_action, n_grid), deterministic grid of candidate actions.
    actions_grid = jnp.stack(
        [jnp.linspace(-1.0, 1.0, n_grid), jnp.linspace(-0.5, 0.5, n_grid)], axis=0
    ).astype(jnp.float32)

    # Single 1-D input = concat([observation, action]).
    x = jax.random.normal(keys[16], (dim_observation + dim_action,), dtype=jnp.float32)

    out = model_ddqn_forward(x, params, actions_grid, dim_observation=dim_observation)
    out = jax.block_until_ready(out)

    ref = _reference_forward(x, params, actions_grid, dim_observation=dim_observation)

    assert out.shape == ()
    assert jnp.allclose(out, ref, atol=1e-4, rtol=1e-4), (out, ref)
    print("KERNEL_OK")
</pallas_src>

<mosaic_0001>
module attributes {stable_mosaic.version = 11 : i64} {
  func.func @_ddqn_kernel(%arg0: memref<1x5xf32, #tpu.memory_space<vmem>>, %arg1: memref<10x7xf32, #tpu.memory_space<vmem>>, %arg2: memref<10x1xf32, #tpu.memory_space<vmem>>, %arg3: memref<5x40xf32, #tpu.memory_space<vmem>>, %arg4: memref<1x40xf32, #tpu.memory_space<vmem>>, %arg5: memref<40x40xf32, #tpu.memory_space<vmem>>, %arg6: memref<1x40xf32, #tpu.memory_space<vmem>>, %arg7: memref<40x40xf32, #tpu.memory_space<vmem>>, %arg8: memref<1x40xf32, #tpu.memory_space<vmem>>, %arg9: memref<40x1xf32, #tpu.memory_space<vmem>>, %arg10: memref<1x1xf32, #tpu.memory_space<vmem>>, %arg11: memref<7x40xf32, #tpu.memory_space<vmem>>, %arg12: memref<1x40xf32, #tpu.memory_space<vmem>>, %arg13: memref<40x40xf32, #tpu.memory_space<vmem>>, %arg14: memref<1x40xf32, #tpu.memory_space<vmem>>, %arg15: memref<40x40xf32, #tpu.memory_space<vmem>>, %arg16: memref<1x40xf32, #tpu.memory_space<vmem>>, %arg17: memref<40x1xf32, #tpu.memory_space<vmem>>, %arg18: memref<1x1xf32, #tpu.memory_space<vmem>>, %arg19: memref<1x1xf32, #tpu.memory_space<vmem>>) attributes {dimension_semantics = [], scalar_prefetch = 0 : i64, scratch_operands = 0 : i64, tpu.core_type = #tpu.core_type<tc>} {
    %c0 = arith.constant 0 : index
    %c0_0 = arith.constant 0 : index
    %0 = vector.load %arg0[%c0, %c0_0] : memref<1x5xf32, #tpu.memory_space<vmem>>, vector<1x5xf32>
    %c0_1 = arith.constant 0 : index
    %c0_2 = arith.constant 0 : index
    %1 = vector.load %arg3[%c0_1, %c0_2] : memref<5x40xf32, #tpu.memory_space<vmem>>, vector<5x40xf32>
    %cst = arith.constant dense<0.000000e+00> : vector<1x40xf32>
    %2 = tpu.matmul %0, %1, %cst {dimension_numbers = #tpu.dot_dimension_numbers<[1], [0], [0], [1], [0, 0, 1, 1], [], []>} : vector<1x5xf32>, vector<5x40xf32>, vector<1x40xf32> -> vector<1x40xf32>
    %c0_3 = arith.constant 0 : index
    %c0_4 = arith.constant 0 : index
    %3 = vector.load %arg4[%c0_3, %c0_4] : memref<1x40xf32, #tpu.memory_space<vmem>>, vector<1x40xf32>
    %4 = arith.addf %2, %3 : vector<1x40xf32>
    %cst_5 = arith.constant 0.000000e+00 : f32
    %5 = vector.broadcast %cst_5 : f32 to vector<1x40xf32>
    %6 = arith.cmpf ogt, %4, %5 : vector<1x40xf32>
    %cst_6 = arith.constant 2.000000e-01 : f32
    %7 = vector.broadcast %cst_6 : f32 to vector<1x40xf32>
    %8 = arith.mulf %7, %4 : vector<1x40xf32>
    %9 = arith.select %6, %4, %8 : vector<1x40xi1>, vector<1x40xf32>
    %c0_7 = arith.constant 0 : index
    %c0_8 = arith.constant 0 : index
    %10 = vector.load %arg5[%c0_7, %c0_8] : memref<40x40xf32, #tpu.memory_space<vmem>>, vector<40x40xf32>
    %cst_9 = arith.constant dense<0.000000e+00> : vector<1x40xf32>
    %11 = tpu.matmul %9, %10, %cst_9 {dimension_numbers = #tpu.dot_dimension_numbers<[1], [0], [0], [1], [0, 0, 1, 1], [], []>} : vector<1x40xf32>, vector<40x40xf32>, vector<1x40xf32> -> vector<1x40xf32>
    %c0_10 = arith.constant 0 : index
    %c0_11 = arith.constant 0 : index
    %12 = vector.load %arg6[%c0_10, %c0_11] : memref<1x40xf32, #tpu.memory_space<vmem>>, vector<1x40xf32>
    %13 = arith.addf %11, %12 : vector<1x40xf32>
    %cst_12 = arith.constant 0.000000e+00 : f32
    %14 = vector.broadcast %cst_12 : f32 to vector<1x40xf32>
    %15 = arith.cmpf ogt, %13, %14 : vector<1x40xf32>
    %cst_13 = arith.constant 2.000000e-01 : f32
    %16 = vector.broadcast %cst_13 : f32 to vector<1x40xf32>
    %17 = arith.mulf %16, %13 : vector<1x40xf32>
    %18 = arith.select %15, %13, %17 : vector<1x40xi1>, vector<1x40xf32>
    %c0_14 = arith.constant 0 : index
    %c0_15 = arith.constant 0 : index
    %19 = vector.load %arg7[%c0_14, %c0_15] : memref<40x40xf32, #tpu.memory_space<vmem>>, vector<40x40xf32>
    %cst_16 = arith.constant dense<0.000000e+00> : vector<1x40xf32>
    %20 = tpu.matmul %18, %19, %cst_16 {dimension_numbers = #tpu.dot_dimension_numbers<[1], [0], [0], [1], [0, 0, 1, 1], [], []>} : vector<1x40xf32>, vector<40x40xf32>, vector<1x40xf32> -> vector<1x40xf32>
    %c0_17 = arith.constant 0 : index
    %c0_18 = arith.constant 0 : index
    %21 = vector.load %arg8[%c0_17, %c0_18] : memref<1x40xf32, #tpu.memory_space<vmem>>, vector<1x40xf32>
    %22 = arith.addf %20, %21 : vector<1x40xf32>
    %cst_19 = arith.constant 0.000000e+00 : f32
    %23 = vector.broadcast %cst_19 : f32 to vector<1x40xf32>
    %24 = arith.cmpf ogt, %22, %23 : vector<1x40xf32>
    %cst_20 = arith.constant 2.000000e-01 : f32
    %25 = vector.broadcast %cst_20 : f32 to vector<1x40xf32>
    %26 = arith.mulf %25, %22 : vector<1x40xf32>
    %27 = arith.select %24, %22, %26 : vector<1x40xi1>, vector<1x40xf32>
    %c0_21 = arith.constant 0 : index
    %c0_22 = arith.constant 0 : index
    %28 = vector.load %arg9[%c0_21, %c0_22] : memref<40x1xf32, #tpu.memory_space<vmem>>, vector<40x1xf32>
    %cst_23 = arith.constant dense<0.000000e+00> : vector<1x1xf32>
    %29 = tpu.matmul %27, %28, %cst_23 {dimension_numbers = #tpu.dot_dimension_numbers<[1], [0], [0], [1], [0, 0, 1, 1], [], []>} : vector<1x40xf32>, vector<40x1xf32>, vector<1x1xf32> -> vector<1x1xf32>
    %c0_24 = arith.constant 0 : index
    %c0_25 = arith.constant 0 : index
    %30 = vector.load %arg10[%c0_24, %c0_25] : memref<1x1xf32, #tpu.memory_space<vmem>>, vector<1x1xf32>
    %31 = arith.addf %29, %30 : vector<1x1xf32>
    %c0_26 = arith.constant 0 : index
    %c0_27 = arith.constant 0 : index
    %32 = vector.load %arg1[%c0_26, %c0_27] : memref<10x7xf32, #tpu.memory_space<vmem>>, vector<10x7xf32>
    %c0_28 = arith.constant 0 : index
    %c0_29 = arith.constant 0 : index
    %33 = vector.load %arg11[%c0_28, %c0_29] : memref<7x40xf32, #tpu.memory_space<vmem>>, vector<7x40xf32>
    %cst_30 = arith.constant dense<0.000000e+00> : vector<10x40xf32>
    %34 = tpu.matmul %32, %33, %cst_30 {dimension_numbers = #tpu.dot_dimension_numbers<[1], [0], [0], [1], [0, 0, 1, 1], [], []>} : vector<10x7xf32>, vector<7x40xf32>, vector<10x40xf32> -> vector<10x40xf32>
    %c0_31 = arith.constant 0 : index
    %c0_32 = arith.constant 0 : index
    %35 = vector.load %arg12[%c0_31, %c0_32] : memref<1x40xf32, #tpu.memory_space<vmem>>, vector<1x40xf32>
    %36 = vector.broadcast %35 : vector<1x40xf32> to vector<10x40xf32>
    %37 = arith.addf %34, %36 : vector<10x40xf32>
    %cst_33 = arith.constant 0.000000e+00 : f32
    %38 = vector.broadcast %cst_33 : f32 to vector<10x40xf32>
    %39 = arith.maximumf %37, %38 : vector<10x40xf32>
    %c0_34 = arith.constant 0 : index
    %c0_35 = arith.constant 0 : index
    %40 = vector.load %arg13[%c0_34, %c0_35] : memref<40x40xf32, #tpu.memory_space<vmem>>, vector<40x40xf32>
    %cst_36 = arith.constant dense<0.000000e+00> : vector<10x40xf32>
    %41 = tpu.matmul %39, %40, %cst_36 {dimension_numbers = #tpu.dot_dimension_numbers<[1], [0], [0], [1], [0, 0, 1, 1], [], []>} : vector<10x40xf32>, vector<40x40xf32>, vector<10x40xf32> -> vector<10x40xf32>
    %c0_37 = arith.constant 0 : index
    %c0_38 = arith.constant 0 : index
    %42 = vector.load %arg14[%c0_37, %c0_38] : memref<1x40xf32, #tpu.memory_space<vmem>>, vector<1x40xf32>
    %43 = vector.broadcast %42 : vector<1x40xf32> to vector<10x40xf32>
    %44 = arith.addf %41, %43 : vector<10x40xf32>
    %cst_39 = arith.constant 0.000000e+00 : f32
    %45 = vector.broadcast %cst_39 : f32 to vector<10x40xf32>
    %46 = arith.maximumf %44, %45 : vector<10x40xf32>
    %c0_40 = arith.constant 0 : index
    %c0_41 = arith.constant 0 : index
    %47 = vector.load %arg15[%c0_40, %c0_41] : memref<40x40xf32, #tpu.memory_space<vmem>>, vector<40x40xf32>
    %cst_42 = arith.constant dense<0.000000e+00> : vector<10x40xf32>
    %48 = tpu.matmul %46, %47, %cst_42 {dimension_numbers = #tpu.dot_dimension_numbers<[1], [0], [0], [1], [0, 0, 1, 1], [], []>} : vector<10x40xf32>, vector<40x40xf32>, vector<10x40xf32> -> vector<10x40xf32>
    %c0_43 = arith.constant 0 : index
    %c0_44 = arith.constant 0 : index
    %49 = vector.load %arg16[%c0_43, %c0_44] : memref<1x40xf32, #tpu.memory_space<vmem>>, vector<1x40xf32>
    %50 = vector.broadcast %49 : vector<1x40xf32> to vector<10x40xf32>
    %51 = arith.addf %48, %50 : vector<10x40xf32>
    %cst_45 = arith.constant 0.000000e+00 : f32
    %52 = vector.broadcast %cst_45 : f32 to vector<10x40xf32>
    %53 = arith.maximumf %51, %52 : vector<10x40xf32>
    %c0_46 = arith.constant 0 : index
    %c0_47 = arith.constant 0 : index
    %54 = vector.load %arg17[%c0_46, %c0_47] : memref<40x1xf32, #tpu.memory_space<vmem>>, vector<40x1xf32>
    %cst_48 = arith.constant dense<0.000000e+00> : vector<10x1xf32>
    %55 = tpu.matmul %53, %54, %cst_48 {dimension_numbers = #tpu.dot_dimension_numbers<[1], [0], [0], [1], [0, 0, 1, 1], [], []>} : vector<10x40xf32>, vector<40x1xf32>, vector<10x1xf32> -> vector<10x1xf32>
    %c0_49 = arith.constant 0 : index
    %c0_50 = arith.constant 0 : index
    %56 = vector.load %arg18[%c0_49, %c0_50] : memref<1x1xf32, #tpu.memory_space<vmem>>, vector<1x1xf32>
    %57 = vector.broadcast %56 : vector<1x1xf32> to vector<10x1xf32>
    %58 = arith.addf %55, %57 : vector<10x1xf32>
    %c0_51 = arith.constant 0 : index
    %c0_52 = arith.constant 0 : index
    %59 = vector.load %arg2[%c0_51, %c0_52] : memref<10x1xf32, #tpu.memory_space<vmem>>, vector<10x1xf32>
    %60 = arith.mulf %58, %59 : vector<10x1xf32>
    %61 = vector.shape_cast %60 : vector<10x1xf32> to vector<1x10x1xf32>
    %cst_53 = arith.constant dense<0.000000e+00> : vector<1xf32>
    %62 = vector.multi_reduction <add>, %61, %cst_53 [1, 2] : vector<1x10x1xf32> to vector<1xf32>
    %63 = vector.shape_cast %62 : vector<1xf32> to vector<1x1x1xf32>
    %64 = vector.extract %63[0, 0, 0] : f32 from vector<1x1x1xf32>
    %65 = vector.broadcast %64 : f32 to vector<1x1xf32>
    %66 = arith.addf %31, %65 : vector<1x1xf32>
    %c0_54 = arith.constant 0 : index
    %c0_55 = arith.constant 0 : index
    %67 = vector.load %arg19[%c0_54, %c0_55] : memref<1x1xf32, #tpu.memory_space<vmem>>, vector<1x1xf32>
    tpu.vector_store %arg19[%c0_54, %c0_55], %66 {strides = array<i32>} : memref<1x1xf32, #tpu.memory_space<vmem>>, vector<1x1xf32>,
    return
  }
}

</mosaic_0001>

<llo_original>
// kernel: tpu_custom_call.1
$region0: #{tpu_custom_call.1}
  #allocation0 [shape = 'u32[]', space=smem, size = 0x4, offset = 0x4, fixed_abs, tag = 'smem constant byte address 0x4 - core index']
  #allocation1 [shape = 'u32[144,128]{1,0:T(1,128)}', space=vmem, size = 0x12000, scoped, tag = 'internal scratch']
  #allocation2 [shape = 'f32[1,1]{1,0:T(1,128)S(1)}', space=vmem, size = 0x200, scoped, tag = 'scoped memory for tpu_custom_call.1']
  #allocation3 [shape = 'f32[1,1]{1,0:T(1,128)S(1)}', space=vmem, size = 0x200, scoped, tag = 'scoped memory for tpu_custom_call.1']
  %s0 = inlined_call_operand.hbm [shape: f32[1,5], index: 0, kind: input, shape index: {}]
  %s1 = inlined_call_operand.vmem [shape: f32[10,7], index: 1, kind: input, shape index: {}]
  %s2 = inlined_call_operand.vmem [shape: f32[10,1], index: 2, kind: input, shape index: {}]
  %s3 = inlined_call_operand.hbm [shape: f32[5,40], index: 3, kind: input, shape index: {}]
  %s4 = inlined_call_operand.hbm [shape: f32[1,40], index: 4, kind: input, shape index: {}]
  %s5 = inlined_call_operand.vmem [shape: f32[40,40], index: 5, kind: input, shape index: {}]
  %s6 = inlined_call_operand.hbm [shape: f32[1,40], index: 6, kind: input, shape index: {}]
  %s7 = inlined_call_operand.vmem [shape: f32[40,40], index: 7, kind: input, shape index: {}]
  %s8 = inlined_call_operand.hbm [shape: f32[1,40], index: 8, kind: input, shape index: {}]
  %s9 = inlined_call_operand.vmem [shape: f32[40,1], index: 9, kind: input, shape index: {}]
  %s10 = inlined_call_operand.<no memory space> [shape: f32[1,1], index: 10, kind: input, shape index: {}]
  %s11 = inlined_call_operand.vmem [shape: f32[7,40], index: 11, kind: input, shape index: {}]
  %s12 = inlined_call_operand.vmem [shape: f32[1,40], index: 12, kind: input, shape index: {}]
  %s13 = inlined_call_operand.vmem [shape: f32[40,40], index: 13, kind: input, shape index: {}]
  %s14 = inlined_call_operand.vmem [shape: f32[1,40], index: 14, kind: input, shape index: {}]
  %s15 = inlined_call_operand.vmem [shape: f32[40,40], index: 15, kind: input, shape index: {}]
  %s16 = inlined_call_operand.vmem [shape: f32[1,40], index: 16, kind: input, shape index: {}]
  %s17 = inlined_call_operand.vmem [shape: f32[40,1], index: 17, kind: input, shape index: {}]
  %s18 = inlined_call_operand.<no memory space> [shape: f32[1,1], index: 18, kind: input, shape index: {}]
  %s19 = inlined_call_operand.hbm [shape: f32[1,1], index: 19, kind: output, shape index: {}]
  %s20 = sld [smem:[#allocation0]]
  $region106: #{tpu_custom_call.1} parent=0
    _
  %s22 = ssub.s32 1, %s20
  %s23 = scalar_select 0, %s22, %s20
  %v24 = vstv %s10
  %25 = vst [vmem:[#allocation2] sm:$0x1] %v24
  %v26 = vstv %s18
  %27 = vst [vmem:[#allocation3] sm:$0x1] %v26
  $region1: #{tpu_custom_call.1} parent=0
    #allocation4 [shape = 'u8[512]{0}', space=vmem, size = 0x400, scoped, tag = 'input window, operand 0, single buffered']
    #allocation5 [shape = 's32[1]{0}', space=sflag, size = 0x4, scoped, tag = 'scoped memory for tpu_custom_call.1']
    #allocation6 [shape = 's32[1]{0}', space=sflag, size = 0x4, scoped, tag = 'scoped memory for tpu_custom_call.1']
    #allocation7 [shape = 'u8[4096]{0}', space=vmem, size = 0x1000, scoped, tag = 'input window, operand 3, single buffered']
    #allocation8 [shape = 's32[1]{0}', space=sflag, size = 0x4, scoped, tag = 'scoped memory for tpu_custom_call.1']
    #allocation9 [shape = 'u8[512]{0}', space=vmem, size = 0x400, scoped, tag = 'input window, operand 4, single buffered']
    #allocation10 [shape = 'u8[512]{0}', space=vmem, size = 0x400, scoped, tag = 'input window, operand 6, single buffered']
    #allocation11 [shape = 's32[1]{0}', space=sflag, size = 0x4, scoped, tag = 'scoped memory for tpu_custom_call.1']
    #allocation12 [shape = 'u8[512]{0}', space=vmem, size = 0x400, scoped, tag = 'input window, operand 8, single buffered']
    #allocation13 [shape = 'u8[512]{0}', space=vmem, size = 0x400, scoped, tag = 'output window, operand 0, single buffered']
    %28 = vsyncpa [#allocation5], 0
    %29 = vsyncpa [#allocation8], 0
    %30 = vsyncpa [#allocation11], 0
    %31 = vsyncpa [#allocation6], 0
    // Predicated region
    $region2: #{tpu_custom_call.1} parent=1 // pred_check
      _
    $region3: #{tpu_custom_call.1} parent=1 // pred_check_branch
      %33 = sbr.rel (0) target = $region5
    $region4: #{tpu_custom_call.1} parent=1 // pred_region
      %s35 = ssub.s32 16, 16
      %36 = vsyncadd [#allocation5], %s35
      %s38 = sshll.u32 [#allocation4], 4
      %s39 = int_to_ptr.vmem [resolvable:$true] %s38
      %41 = dma.hbm_to_vmem [thread:$0]  %s0, 16, %s39, [#allocation5]
    $region5: #{tpu_custom_call.1} parent=1 // pred_fallthru
      _
    // Predicated region
    $region6: #{tpu_custom_call.1} parent=1 // pred_check
      _
    $region7: #{tpu_custom_call.1} parent=1 // pred_check_branch
      %43 = sbr.rel (0) target = $region9
    $region8: #{tpu_custom_call.1} parent=1 // pred_region
      _
    $region9: #{tpu_custom_call.1} parent=1 // pred_fallthru
      _
    // Predicated region
    $region10: #{tpu_custom_call.1} parent=1 // pred_check
      _
    $region11: #{tpu_custom_call.1} parent=1 // pred_check_branch
      %45 = sbr.rel (0) target = $region13
    $region12: #{tpu_custom_call.1} parent=1 // pred_region
      _
    $region13: #{tpu_custom_call.1} parent=1 // pred_fallthru
      _
    // Predicated region
    $region14: #{tpu_custom_call.1} parent=1 // pred_check
      _
    $region15: #{tpu_custom_call.1} parent=1 // pred_check_branch
      %47 = sbr.rel (0) target = $region17
    $region16: #{tpu_custom_call.1} parent=1 // pred_region
      %s49 = ssub.s32 128, 128
      %50 = vsyncadd [#allocation8], %s49
      %s52 = sshll.u32 [#allocation7], 4
      %s53 = int_to_ptr.vmem [resolvable:$true] %s52
      %55 = dma.hbm_to_vmem [thread:$0]  %s3, 128, %s53, [#allocation8]
    $region17: #{tpu_custom_call.1} parent=1 // pred_fallthru
      _
    // Predicated region
    $region18: #{tpu_custom_call.1} parent=1 // pred_check
      _
    $region19: #{tpu_custom_call.1} parent=1 // pred_check_branch
      %57 = sbr.rel (0) target = $region21
    $region20: #{tpu_custom_call.1} parent=1 // pred_region
      %s59 = ssub.s32 16, 16
      %60 = vsyncadd [#allocation8], %s59
      %s62 = sshll.u32 [#allocation9], 4
      %s63 = int_to_ptr.vmem [resolvable:$true] %s62
      %65 = dma.hbm_to_vmem [thread:$0]  %s4, 16, %s63, [#allocation8]
    $region21: #{tpu_custom_call.1} parent=1 // pred_fallthru
      _
    // Predicated region
    $region22: #{tpu_custom_call.1} parent=1 // pred_check
      _
    $region23: #{tpu_custom_call.1} parent=1 // pred_check_branch
      %67 = sbr.rel (0) target = $region25
    $region24: #{tpu_custom_call.1} parent=1 // pred_region
      _
    $region25: #{tpu_custom_call.1} parent=1 // pred_fallthru
      _
    // Predicated region
    $region26: #{tpu_custom_call.1} parent=1 // pred_check
      _
    $region27: #{tpu_custom_call.1} parent=1 // pred_check_branch
      %69 = sbr.rel (0) target = $region29
    $region28: #{tpu_custom_call.1} parent=1 // pred_region
      %s71 = ssub.s32 16, 16
      %72 = vsyncadd [#allocation11], %s71
      %s74 = sshll.u32 [#allocation10], 4
      %s75 = int_to_ptr.vmem [resolvable:$true] %s74
      %77 = dma.hbm_to_vmem [thread:$0]  %s6, 16, %s75, [#allocation11]
    $region29: #{tpu_custom_call.1} parent=1 // pred_fallthru
      _
    // Predicated region
    $region30: #{tpu_custom_call.1} parent=1 // pred_check
      _
    $region31: #{tpu_custom_call.1} parent=1 // pred_check_branch
      %79 = sbr.rel (0) target = $region33
    $region32: #{tpu_custom_call.1} parent=1 // pred_region
      _
    $region33: #{tpu_custom_call.1} parent=1 // pred_fallthru
      _
    // Predicated region
    $region34: #{tpu_custom_call.1} parent=1 // pred_check
      _
    $region35: #{tpu_custom_call.1} parent=1 // pred_check_branch
      %81 = sbr.rel (0) target = $region37
    $region36: #{tpu_custom_call.1} parent=1 // pred_region
      %s83 = ssub.s32 16, 16
      %84 = vsyncadd [#allocation11], %s83
      %s86 = sshll.u32 [#allocation12], 4
      %s87 = int_to_ptr.vmem [resolvable:$true] %s86
      %89 = dma.hbm_to_vmem [thread:$0]  %s8, 16, %s87, [#allocation11]
    $region37: #{tpu_custom_call.1} parent=1 // pred_fallthru
      _
    // Predicated region
    $region38: #{tpu_custom_call.1} parent=1 // pred_check
      _
    $region39: #{tpu_custom_call.1} parent=1 // pred_check_branch
      %91 = sbr.rel (0) target = $region41
    $region40: #{tpu_custom_call.1} parent=1 // pred_region
      _
    $region41: #{tpu_custom_call.1} parent=1 // pred_fallthru
      _
    // Predicated region
    $region42: #{tpu_custom_call.1} parent=1 // pred_check
      _
    $region43: #{tpu_custom_call.1} parent=1 // pred_check_branch
      %93 = sbr.rel (0) target = $region45
    $region44: #{tpu_custom_call.1} parent=1 // pred_region
      _
    $region45: #{tpu_custom_call.1} parent=1 // pred_fallthru
      _
    // Predicated region
    $region46: #{tpu_custom_call.1} parent=1 // pred_check
      _
    $region47: #{tpu_custom_call.1} parent=1 // pred_check_branch
      %95 = sbr.rel (0) target = $region49
    $region48: #{tpu_custom_call.1} parent=1 // pred_region
      _
    $region49: #{tpu_custom_call.1} parent=1 // pred_fallthru
      _
    // Predicated region
    $region50: #{tpu_custom_call.1} parent=1 // pred_check
      _
    $region51: #{tpu_custom_call.1} parent=1 // pred_check_branch
      %97 = sbr.rel (0) target = $region53
    $region52: #{tpu_custom_call.1} parent=1 // pred_region
      _
    $region53: #{tpu_custom_call.1} parent=1 // pred_fallthru
      _
    // Predicated region
    $region54: #{tpu_custom_call.1} parent=1 // pred_check
      _
    $region55: #{tpu_custom_call.1} parent=1 // pred_check_branch
      %99 = sbr.rel (0) target = $region57
    $region56: #{tpu_custom_call.1} parent=1 // pred_region
      _
    $region57: #{tpu_custom_call.1} parent=1 // pred_fallthru
      _
    // Predicated region
    $region58: #{tpu_custom_call.1} parent=1 // pred_check
      _
    $region59: #{tpu_custom_call.1} parent=1 // pred_check_branch
      %101 = sbr.rel (0) target = $region61
    $region60: #{tpu_custom_call.1} parent=1 // pred_region
      _
    $region61: #{tpu_custom_call.1} parent=1 // pred_fallthru
      _
    // Predicated region
    $region62: #{tpu_custom_call.1} parent=1 // pred_check
      _
    $region63: #{tpu_custom_call.1} parent=1 // pred_check_branch
      %103 = sbr.rel (0) target = $region65
    $region64: #{tpu_custom_call.1} parent=1 // pred_region
      _
    $region65: #{tpu_custom_call.1} parent=1 // pred_fallthru
      _
    // Predicated region
    $region66: #{tpu_custom_call.1} parent=1 // pred_check
      _
    $region67: #{tpu_custom_call.1} parent=1 // pred_check_branch
      %105 = sbr.rel (0) target = $region69
    $region68: #{tpu_custom_call.1} parent=1 // pred_region
      _
    $region69: #{tpu_custom_call.1} parent=1 // pred_fallthru
      _
    // Predicated region
    $region70: #{tpu_custom_call.1} parent=1 // pred_check
      _
    $region71: #{tpu_custom_call.1} parent=1 // pred_check_branch
      %107 = sbr.rel (0) target = $region73
    $region72: #{tpu_custom_call.1} parent=1 // pred_region
      _
    $region73: #{tpu_custom_call.1} parent=1 // pred_fallthru
      _
    // Predicated region
    $region74: #{tpu_custom_call.1} parent=1 // pred_check
      _
    $region75: #{tpu_custom_call.1} parent=1 // pred_check_branch
      %109 = sbr.rel (0) target = $region77
    $region76: #{tpu_custom_call.1} parent=1 // pred_region
      _
    $region77: #{tpu_custom_call.1} parent=1 // pred_fallthru
      _
    // Predicated region
    $region78: #{tpu_custom_call.1} parent=1 // pred_check
      _
    $region79: #{tpu_custom_call.1} parent=1 // pred_check_branch
      %111 = sbr.rel (0) target = $region81
    $region80: #{tpu_custom_call.1} parent=1 // pred_region
      %112 = dma.done [#allocation5], 16
    $region81: #{tpu_custom_call.1} parent=1 // pred_fallthru
      _
    // Predicated region
    $region82: #{tpu_custom_call.1} parent=1 // pred_check
      _
    $region83: #{tpu_custom_call.1} parent=1 // pred_check_branch
      %114 = sbr.rel (0) target = $region85
    $region84: #{tpu_custom_call.1} parent=1 // pred_region
      %115 = dma.done [#allocation8], 128
    $region85: #{tpu_custom_call.1} parent=1 // pred_fallthru
      _
    // Predicated region
    $region86: #{tpu_custom_call.1} parent=1 // pred_check
      _
    $region87: #{tpu_custom_call.1} parent=1 // pred_check_branch
      %117 = sbr.rel (0) target = $region89
    $region88: #{tpu_custom_call.1} parent=1 // pred_region
      %118 = dma.done [#allocation8], 16
    $region89: #{tpu_custom_call.1} parent=1 // pred_fallthru
      _
    // Predicated region
    $region90: #{tpu_custom_call.1} parent=1 // pred_check
      _
    $region91: #{tpu_custom_call.1} parent=1 // pred_check_branch
      %120 = sbr.rel (0) target = $region93
    $region92: #{tpu_custom_call.1} parent=1 // pred_region
      %121 = dma.done [#allocation11], 16
    $region93: #{tpu_custom_call.1} parent=1 // pred_fallthru
      _
    // Predicated region
    $region94: #{tpu_custom_call.1} parent=1 // pred_check
      _
    $region95: #{tpu_custom_call.1} parent=1 // pred_check_branch
      %123 = sbr.rel (0) target = $region97
    $region96: #{tpu_custom_call.1} parent=1 // pred_region
      %124 = dma.done [#allocation11], 16
    $region97: #{tpu_custom_call.1} parent=1 // pred_fallthru
      _
    %v125 = vld [vmem:[#allocation4] sm:$0x1]
    %v126 = vld [vmem:[#allocation7] sm:$0x1f]
    %v127 = vld [vmem:[#allocation9] sm:$0x1]
    %vm128 = vcmask 39936
    %v130 = vsel %vm128, %v125, 0
    %vm132 = vcmask 1044480
    %v134 = vsel %vm132, %v126, 0
    %136 = vmatprep.subr.mxu0 0.0
    %137 = vmatpush1.msra.mxu0 %v134
    %138 = vmatprep.subr.mxu0 0.0
    %139 = vmatpush1.msra.mxu0 0.0
    %140 = vmatprep.subr.mxu0 0.0
    %141 = vmatpush1.msra.mxu0 0.0
    %142 = vmatprep.subr.mxu0 0.0
    %143 = vmatpush1.msra.mxu0 0.0
    %144 = vmatprep.subr.mxu0 0.0
    %145 = vmatpush1.msra.mxu0 0.0
    %146 = vmatprep.subr.mxu0 0.0
    %147 = vmatpush1.msra.mxu0 0.0
    %148 = vmatprep.subr.mxu0 0.0
    %149 = vmatpush1.msra.mxu0 0.0
    %150 = vmatprep.subr.mxu0 0.0
    %151 = vmatpush1.msra.mxu0 0.0
    %152 = vmatprep.subr.mxu0 0.0
    %153 = vmatpush1.msra.mxu0 0.0
    %154 = vmatprep.subr.mxu0 0.0
    %155 = vmatpush1.msra.mxu0 0.0
    %156 = vmatprep.subr.mxu0 0.0
    %157 = vmatpush1.msra.mxu0 0.0
    %158 = vmatprep.subr.mxu0 0.0
    %159 = vmatpush1.msra.mxu0 0.0
    %160 = vmatprep.subr.mxu0 0.0
    %161 = vmatpush1.msra.mxu0 0.0
    %162 = vmatprep.subr.mxu0 0.0
    %163 = vmatpush1.msra.mxu0 0.0
    %164 = vmatprep.subr.mxu0 0.0
    %165 = vmatpush1.msra.mxu0 0.0
    %166 = vmatprep.subr.mxu0 0.0
    %167 = vmatpush1.msra.mxu0 0.0
    %168 = vmatprep.subr.mxu0 0.0
    %169 = vmatpush1.msra.mxu0 0.0
    %170 = vmatprep.subr.mxu0 0.0
    %171 = vmatpush1.msra.mxu0 0.0
    %172 = vmatprep.subr.mxu0 0.0
    %173 = vmatpush1.msra.mxu0 0.0
    %174 = vmatprep.subr.mxu0 0.0
    %175 = vmatpush1.msra.mxu0 0.0
    %176 = vmatprep.subr.mxu0 0.0
    %177 = vmatpush1.msra.mxu0 0.0
    %178 = vmatprep.subr.mxu0 0.0
    %179 = vmatpush1.msra.mxu0 0.0
    %180 = vmatprep.subr.mxu0 0.0
    %181 = vmatpush1.msra.mxu0 0.0
    %182 = vmatprep.subr.mxu0 0.0
    %183 = vmatpush1.msra.mxu0 0.0
    %184 = vmatprep.subr.mxu0 0.0
    %185 = vmatpush1.msra.mxu0 0.0
    %186 = vmatprep.subr.mxu0 0.0
    %187 = vmatpush1.msra.mxu0 0.0
    %188 = vmatprep.subr.mxu0 0.0
    %189 = vmatpush1.msra.mxu0 0.0
    %190 = vmatprep.subr.mxu0 0.0
    %191 = vmatpush1.msra.mxu0 0.0
    %192 = vmatprep.subr.mxu0 0.0
    %193 = vmatpush1.msra.mxu0 0.0
    %194 = vmatprep.subr.mxu0 0.0
    %195 = vmatpush1.msra.mxu0 0.0
    %196 = vmatprep.subr.mxu0 0.0
    %197 = vmatpush1.msra.mxu0 0.0
    %198 = vmatprep.subr.mxu0 0.0
    %199 = vmatpush1.msra.mxu0 0.0
    %200 = vmatprep.mubr.f32.mxu0 0.0
    %201 = vmatmul.mubr.f32.gmra.mrb[0].mxu0 %v130
    %v202 = vpop.f32.mrb[0].mxu0
    %v203 = vadd.f32 %v127, %v202
    %v204 = vpop.f32.mrb[0].mxu0
    %205 = vdwg.mxu0
    %vm206 = vcmp.gt.f32.partialorder %v203, 0.0
    %v207 = vmul.f32 %v203, 0.2
    %v208 = vsel %vm206, %v203, %v207
    %v209 = vld [vmem:[%s5] sm:$0xff]
    %v210 = vld [vmem:[%s5 + $0x8] sm:$0xff]
    %v211 = vld [vmem:[%s5 + $0x10] sm:$0xff]
    %v212 = vld [vmem:[%s5 + $0x18] sm:$0xff]
    %v213 = vld [vmem:[%s5 + $0x20] sm:$0xff]
    %v214 = vld [vmem:[#allocation10] sm:$0x1]
    %vm215 = vcmask 326656
    %v217 = vsel %vm215, %v208, 0
    %219 = vmatprep.subr.mxu0 0.0
    %220 = vmatpush1.msra.mxu0 %v209
    %221 = vmatprep.subr.mxu0 0.0
    %222 = vmatpush1.msra.mxu0 %v210
    %223 = vmatprep.subr.mxu0 0.0
    %224 = vmatpush1.msra.mxu0 %v211
    %225 = vmatprep.subr.mxu0 0.0
    %226 = vmatpush1.msra.mxu0 %v212
    %227 = vmatprep.subr.mxu0 0.0
    %228 = vmatpush1.msra.mxu0 %v213
    %229 = vmatprep.subr.mxu0 0.0
    %230 = vmatpush1.msra.mxu0 0.0
    %231 = vmatprep.subr.mxu0 0.0
    %232 = vmatpush1.msra.mxu0 0.0
    %233 = vmatprep.subr.mxu0 0.0
    %234 = vmatpush1.msra.mxu0 0.0
    %235 = vmatprep.subr.mxu0 0.0
    %236 = vmatpush1.msra.mxu0 0.0
    %237 = vmatprep.subr.mxu0 0.0
    %238 = vmatpush1.msra.mxu0 0.0
    %239 = vmatprep.subr.mxu0 0.0
    %240 = vmatpush1.msra.mxu0 0.0
    %241 = vmatprep.subr.mxu0 0.0
    %242 = vmatpush1.msra.mxu0 0.0
    %243 = vmatprep.subr.mxu0 0.0
    %244 = vmatpush1.msra.mxu0 0.0
    %245 = vmatprep.subr.mxu0 0.0
    %246 = vmatpush1.msra.mxu0 0.0
    %247 = vmatprep.subr.mxu0 0.0
    %248 = vmatpush1.msra.mxu0 0.0
    %249 = vmatprep.subr.mxu0 0.0
    %250 = vmatpush1.msra.mxu0 0.0
    %251 = vmatprep.subr.mxu0 0.0
    %252 = vmatpush1.msra.mxu0 0.0
    %253 = vmatprep.subr.mxu0 0.0
    %254 = vmatpush1.msra.mxu0 0.0
    %255 = vmatprep.subr.mxu0 0.0
    %256 = vmatpush1.msra.mxu0 0.0
    %257 = vmatprep.subr.mxu0 0.0
    %258 = vmatpush1.msra.mxu0 0.0
    %259 = vmatprep.subr.mxu0 0.0
    %260 = vmatpush1.msra.mxu0 0.0
    %261 = vmatprep.subr.mxu0 0.0
    %262 = vmatpush1.msra.mxu0 0.0
    %263 = vmatprep.subr.mxu0 0.0
    %264 = vmatpush1.msra.mxu0 0.0
    %265 = vmatprep.subr.mxu0 0.0
    %266 = vmatpush1.msra.mxu0 0.0
    %267 = vmatprep.subr.mxu0 0.0
    %268 = vmatpush1.msra.mxu0 0.0
    %269 = vmatprep.subr.mxu0 0.0
    %270 = vmatpush1.msra.mxu0 0.0
    %271 = vmatprep.subr.mxu0 0.0
    %272 = vmatpush1.msra.mxu0 0.0
    %273 = vmatprep.subr.mxu0 0.0
    %274 = vmatpush1.msra.mxu0 0.0
    %275 = vmatprep.subr.mxu0 0.0
    %276 = vmatpush1.msra.mxu0 0.0
    %277 = vmatprep.subr.mxu0 0.0
    %278 = vmatpush1.msra.mxu0 0.0
    %279 = vmatprep.subr.mxu0 0.0
    %280 = vmatpush1.msra.mxu0 0.0
    %281 = vmatprep.subr.mxu0 0.0
    %282 = vmatpush1.msra.mxu0 0.0
    %283 = vmatprep.mubr.f32.mxu0 0.0
    %284 = vmatmul.mubr.f32.gmra.mrb[0].mxu0 %v217
    %v285 = vpop.f32.mrb[0].mxu0
    %v286 = vadd.f32 %v214, %v285
    %v287 = vpop.f32.mrb[0].mxu0
    %288 = vdwg.mxu0
    %vm289 = vcmp.gt.f32.partialorder %v286, 0.0
    %v290 = vmul.f32 %v286, 0.2
    %v291 = vsel %vm289, %v286, %v290
    %v292 = vld [vmem:[%s7] sm:$0xff]
    %v293 = vld [vmem:[%s7 + $0x8] sm:$0xff]
    %v294 = vld [vmem:[%s7 + $0x10] sm:$0xff]
    %v295 = vld [vmem:[%s7 + $0x18] sm:$0xff]
    %v296 = vld [vmem:[%s7 + $0x20] sm:$0xff]
    %v297 = vld [vmem:[#allocation12] sm:$0x1]
    %v299 = vsel %vm215, %v291, 0
    %301 = vmatprep.subr.mxu0 0.0
    %302 = vmatpush1.msra.mxu0 %v292
    %303 = vmatprep.subr.mxu0 0.0
    %304 = vmatpush1.msra.mxu0 %v293
    %305 = vmatprep.subr.mxu0 0.0
    %306 = vmatpush1.msra.mxu0 %v294
    %307 = vmatprep.subr.mxu0 0.0
    %308 = vmatpush1.msra.mxu0 %v295
    %309 = vmatprep.subr.mxu0 0.0
    %310 = vmatpush1.msra.mxu0 %v296
    %311 = vmatprep.subr.mxu0 0.0
    %312 = vmatpush1.msra.mxu0 0.0
    %313 = vmatprep.subr.mxu0 0.0
    %314 = vmatpush1.msra.mxu0 0.0
    %315 = vmatprep.subr.mxu0 0.0
    %316 = vmatpush1.msra.mxu0 0.0
    %317 = vmatprep.subr.mxu0 0.0
    %318 = vmatpush1.msra.mxu0 0.0
    %319 = vmatprep.subr.mxu0 0.0
    %320 = vmatpush1.msra.mxu0 0.0
    %321 = vmatprep.subr.mxu0 0.0
    %322 = vmatpush1.msra.mxu0 0.0
    %323 = vmatprep.subr.mxu0 0.0
    %324 = vmatpush1.msra.mxu0 0.0
    %325 = vmatprep.subr.mxu0 0.0
    %326 = vmatpush1.msra.mxu0 0.0
    %327 = vmatprep.subr.mxu0 0.0
    %328 = vmatpush1.msra.mxu0 0.0
    %329 = vmatprep.subr.mxu0 0.0
    %330 = vmatpush1.msra.mxu0 0.0
    %331 = vmatprep.subr.mxu0 0.0
    %332 = vmatpush1.msra.mxu0 0.0
    %333 = vmatprep.subr.mxu0 0.0
    %334 = vmatpush1.msra.mxu0 0.0
    %335 = vmatprep.subr.mxu0 0.0
    %336 = vmatpush1.msra.mxu0 0.0
    %337 = vmatprep.subr.mxu0 0.0
    %338 = vmatpush1.msra.mxu0 0.0
    %339 = vmatprep.subr.mxu0 0.0
    %340 = vmatpush1.msra.mxu0 0.0
    %341 = vmatprep.subr.mxu0 0.0
    %342 = vmatpush1.msra.mxu0 0.0
    %343 = vmatprep.subr.mxu0 0.0
    %344 = vmatpush1.msra.mxu0 0.0
    %345 = vmatprep.subr.mxu0 0.0
    %346 = vmatpush1.msra.mxu0 0.0
    %347 = vmatprep.subr.mxu0 0.0
    %348 = vmatpush1.msra.mxu0 0.0
    %349 = vmatprep.subr.mxu0 0.0
    %350 = vmatpush1.msra.mxu0 0.0
    %351 = vmatprep.subr.mxu0 0.0
    %352 = vmatpush1.msra.mxu0 0.0
    %353 = vmatprep.subr.mxu0 0.0
    %354 = vmatpush1.msra.mxu0 0.0
    %355 = vmatprep.subr.mxu0 0.0
    %356 = vmatpush1.msra.mxu0 0.0
    %357 = vmatprep.subr.mxu0 0.0
    %358 = vmatpush1.msra.mxu0 0.0
    %359 = vmatprep.subr.mxu0 0.0
    %360 = vmatpush1.msra.mxu0 0.0
    %361 = vmatprep.subr.mxu0 0.0
    %362 = vmatpush1.msra.mxu0 0.0
    %363 = vmatprep.subr.mxu0 0.0
    %364 = vmatpush1.msra.mxu0 0.0
    %365 = vmatprep.mubr.f32.mxu0 0.0
    %366 = vmatmul.mubr.f32.gmra.mrb[0].mxu0 %v299
    %v367 = vpop.f32.mrb[0].mxu0
    %v368 = vadd.f32 %v297, %v367
    %v369 = vpop.f32.mrb[0].mxu0
    %370 = vdwg.mxu0
    %vm371 = vcmp.gt.f32.partialorder %v368, 0.0
    %v372 = vmul.f32 %v368, 0.2
    %v373 = vsel %vm371, %v368, %v372
    %v374 = vld [vmem:[%s9] sm:$0xff]
    %v375 = vld [vmem:[%s9 + $0x8] sm:$0xff]
    %v376 = vld [vmem:[%s9 + $0x10] sm:$0xff]
    %v377 = vld [vmem:[%s9 + $0x18] sm:$0xff]
    %v378 = vld [vmem:[%s9 + $0x20] sm:$0xff]
    %v379 = vld [vmem:[#allocation2] sm:$0x1]
    %v381 = vsel %vm215, %v373, 0
    %383 = vmatprep.subr.mxu0 0.0
    %384 = vmatpush1.msra.mxu0 %v374
    %385 = vmatprep.subr.mxu0 0.0
    %386 = vmatpush1.msra.mxu0 %v375
    %387 = vmatprep.subr.mxu0 0.0
    %388 = vmatpush1.msra.mxu0 %v376
    %389 = vmatprep.subr.mxu0 0.0
    %390 = vmatpush1.msra.mxu0 %v377
    %391 = vmatprep.subr.mxu0 0.0
    %392 = vmatpush1.msra.mxu0 %v378
    %393 = vmatprep.subr.mxu0 0.0
    %394 = vmatpush1.msra.mxu0 0.0
    %395 = vmatprep.subr.mxu0 0.0
    %396 = vmatpush1.msra.mxu0 0.0
    %397 = vmatprep.subr.mxu0 0.0
    %398 = vmatpush1.msra.mxu0 0.0
    %399 = vmatprep.subr.mxu0 0.0
    %400 = vmatpush1.msra.mxu0 0.0
    %401 = vmatprep.subr.mxu0 0.0
    %402 = vmatpush1.msra.mxu0 0.0
    %403 = vmatprep.subr.mxu0 0.0
    %404 = vmatpush1.msra.mxu0 0.0
    %405 = vmatprep.subr.mxu0 0.0
    %406 = vmatpush1.msra.mxu0 0.0
    %407 = vmatprep.subr.mxu0 0.0
    %408 = vmatpush1.msra.mxu0 0.0
    %409 = vmatprep.subr.mxu0 0.0
    %410 = vmatpush1.msra.mxu0 0.0
    %411 = vmatprep.subr.mxu0 0.0
    %412 = vmatpush1.msra.mxu0 0.0
    %413 = vmatprep.subr.mxu0 0.0
    %414 = vmatpush1.msra.mxu0 0.0
    %415 = vmatprep.subr.mxu0 0.0
    %416 = vmatpush1.msra.mxu0 0.0
    %417 = vmatprep.subr.mxu0 0.0
    %418 = vmatpush1.msra.mxu0 0.0
    %419 = vmatprep.subr.mxu0 0.0
    %420 = vmatpush1.msra.mxu0 0.0
    %421 = vmatprep.subr.mxu0 0.0
    %422 = vmatpush1.msra.mxu0 0.0
    %423 = vmatprep.subr.mxu0 0.0
    %424 = vmatpush1.msra.mxu0 0.0
    %425 = vmatprep.subr.mxu0 0.0
    %426 = vmatpush1.msra.mxu0 0.0
    %427 = vmatprep.subr.mxu0 0.0
    %428 = vmatpush1.msra.mxu0 0.0
    %429 = vmatprep.subr.mxu0 0.0
    %430 = vmatpush1.msra.mxu0 0.0
    %431 = vmatprep.subr.mxu0 0.0
    %432 = vmatpush1.msra.mxu0 0.0
    %433 = vmatprep.subr.mxu0 0.0
    %434 = vmatpush1.msra.mxu0 0.0
    %435 = vmatprep.subr.mxu0 0.0
    %436 = vmatpush1.msra.mxu0 0.0
    %437 = vmatprep.subr.mxu0 0.0
    %438 = vmatpush1.msra.mxu0 0.0
    %439 = vmatprep.subr.mxu0 0.0
    %440 = vmatpush1.msra.mxu0 0.0
    %441 = vmatprep.subr.mxu0 0.0
    %442 = vmatpush1.msra.mxu0 0.0
    %443 = vmatprep.subr.mxu0 0.0
    %444 = vmatpush1.msra.mxu0 0.0
    %445 = vmatprep.subr.mxu0 0.0
    %446 = vmatpush1.msra.mxu0 0.0
    %447 = vmatprep.mubr.f32.mxu0 0.0
    %448 = vmatmul.mubr.f32.gmra.mrb[0].mxu0 %v381
    %v449 = vpop.f32.mrb[0].mxu0
    %v450 = vadd.f32 %v379, %v449
    %v451 = vpop.f32.mrb[0].mxu0
    %452 = vdwg.mxu0
    %v453 = vld [vmem:[%s1] sm:$0xff]
    %v454 = vld [vmem:[%s1 + $0x8] sm:$0x3]
    %v455 = vld [vmem:[%s11] sm:$0x7f]
    %v456 = vld [vmem:[%s12] sm:$0x1]
    %v458 = vlaneseq
    %v459 = vshrl.u32 %v458, 7
    %v460 = vsub.s32 0, %v459
    %v461 = vrot.slane %v456, %v460
    %vm463 = vcmask 56320
    %v465 = vsel %vm463, %v453, 0
    %v468 = vsel %vm463, %v454, 0
    %vm470 = vcmask 1046528
    %v472 = vsel %vm470, %v455, 0
    %474 = vmatprep.subr.mxu0 0.0
    %475 = vmatpush1.msra.mxu0 %v472
    %476 = vmatprep.subr.mxu0 0.0
    %477 = vmatpush1.msra.mxu0 0.0
    %478 = vmatprep.subr.mxu0 0.0
    %479 = vmatpush1.msra.mxu0 0.0
    %480 = vmatprep.subr.mxu0 0.0
    %481 = vmatpush1.msra.mxu0 0.0
    %482 = vmatprep.subr.mxu0 0.0
    %483 = vmatpush1.msra.mxu0 0.0
    %484 = vmatprep.subr.mxu0 0.0
    %485 = vmatpush1.msra.mxu0 0.0
    %486 = vmatprep.subr.mxu0 0.0
    %487 = vmatpush1.msra.mxu0 0.0
    %488 = vmatprep.subr.mxu0 0.0
    %489 = vmatpush1.msra.mxu0 0.0
    %490 = vmatprep.subr.mxu0 0.0
    %491 = vmatpush1.msra.mxu0 0.0
    %492 = vmatprep.subr.mxu0 0.0
    %493 = vmatpush1.msra.mxu0 0.0
    %494 = vmatprep.subr.mxu0 0.0
    %495 = vmatpush1.msra.mxu0 0.0
    %496 = vmatprep.subr.mxu0 0.0
    %497 = vmatpush1.msra.mxu0 0.0
    %498 = vmatprep.subr.mxu0 0.0
    %499 = vmatpush1.msra.mxu0 0.0
    %500 = vmatprep.subr.mxu0 0.0
    %501 = vmatpush1.msra.mxu0 0.0
    %502 = vmatprep.subr.mxu0 0.0
    %503 = vmatpush1.msra.mxu0 0.0
    %504 = vmatprep.subr.mxu0 0.0
    %505 = vmatpush1.msra.mxu0 0.0
    %506 = vmatprep.subr.mxu0 0.0
    %507 = vmatpush1.msra.mxu0 0.0
    %508 = vmatprep.subr.mxu0 0.0
    %509 = vmatpush1.msra.mxu0 0.0
    %510 = vmatprep.subr.mxu0 0.0
    %511 = vmatpush1.msra.mxu0 0.0
    %512 = vmatprep.subr.mxu0 0.0
    %513 = vmatpush1.msra.mxu0 0.0
    %514 = vmatprep.subr.mxu0 0.0
    %515 = vmatpush1.msra.mxu0 0.0
    %516 = vmatprep.subr.mxu0 0.0
    %517 = vmatpush1.msra.mxu0 0.0
    %518 = vmatprep.subr.mxu0 0.0
    %519 = vmatpush1.msra.mxu0 0.0
    %520 = vmatprep.subr.mxu0 0.0
    %521 = vmatpush1.msra.mxu0 0.0
    %522 = vmatprep.subr.mxu0 0.0
    %523 = vmatpush1.msra.mxu0 0.0
    %524 = vmatprep.subr.mxu0 0.0
    %525 = vmatpush1.msra.mxu0 0.0
    %526 = vmatprep.subr.mxu0 0.0
    %527 = vmatpush1.msra.mxu0 0.0
    %528 = vmatprep.subr.mxu0 0.0
    %529 = vmatpush1.msra.mxu0 0.0
    %530 = vmatprep.subr.mxu0 0.0
    %531 = vmatpush1.msra.mxu0 0.0
    %532 = vmatprep.subr.mxu0 0.0
    %533 = vmatpush1.msra.mxu0 0.0
    %534 = vmatprep.subr.mxu0 0.0
    %535 = vmatpush1.msra.mxu0 0.0
    %536 = vmatprep.subr.mxu0 0.0
    %537 = vmatpush1.msra.mxu0 0.0
    %538 = vmatprep.mubr.f32.mxu0 0.0
    %539 = vmatmul.mubr.f32.gmra.mrb[0].mxu0 %v465
    %v540 = vpop.f32.mrb[0].mxu0
    %v541 = vadd.f32 %v461, %v540
    %v542 = vpop.f32.mrb[0].mxu0
    %543 = vmatprep.mubr.f32.mxu0 0.0
    %544 = vmatmul.mubr.f32.gmra.mrb[0].mxu0 %v468
    %v545 = vpop.f32.mrb[0].mxu0
    %v546 = vadd.f32 %v461, %v545
    %v547 = vpop.f32.mrb[0].mxu0
    %548 = vdwg.mxu0
    %v549 = vmax.f32 %v541, 0.0
    %v550 = vmax.f32 %v546, 0.0
    %v551 = vld [vmem:[%s13] sm:$0xff]
    %v552 = vld [vmem:[%s13 + $0x8] sm:$0xff]
    %v553 = vld [vmem:[%s13 + $0x10] sm:$0xff]
    %v554 = vld [vmem:[%s13 + $0x18] sm:$0xff]
    %v555 = vld [vmem:[%s13 + $0x20] sm:$0xff]
    %v556 = vld [vmem:[%s14] sm:$0x1]
    %v558 = vlaneseq
    %v559 = vshrl.u32 %v558, 7
    %v560 = vsub.s32 0, %v559
    %v561 = vrot.slane %v556, %v560
    %v564 = vsel %vm215, %v549, 0
    %v567 = vsel %vm215, %v550, 0
    %569 = vmatprep.subr.mxu0 0.0
    %570 = vmatpush1.msra.mxu0 %v551
    %571 = vmatprep.subr.mxu0 0.0
    %572 = vmatpush1.msra.mxu0 %v552
    %573 = vmatprep.subr.mxu0 0.0
    %574 = vmatpush1.msra.mxu0 %v553
    %575 = vmatprep.subr.mxu0 0.0
    %576 = vmatpush1.msra.mxu0 %v554
    %577 = vmatprep.subr.mxu0 0.0
    %578 = vmatpush1.msra.mxu0 %v555
    %579 = vmatprep.subr.mxu0 0.0
    %580 = vmatpush1.msra.mxu0 0.0
    %581 = vmatprep.subr.mxu0 0.0
    %582 = vmatpush1.msra.mxu0 0.0
    %583 = vmatprep.subr.mxu0 0.0
    %584 = vmatpush1.msra.mxu0 0.0
    %585 = vmatprep.subr.mxu0 0.0
    %586 = vmatpush1.msra.mxu0 0.0
    %587 = vmatprep.subr.mxu0 0.0
    %588 = vmatpush1.msra.mxu0 0.0
    %589 = vmatprep.subr.mxu0 0.0
    %590 = vmatpush1.msra.mxu0 0.0
    %591 = vmatprep.subr.mxu0 0.0
    %592 = vmatpush1.msra.mxu0 0.0
    %593 = vmatprep.subr.mxu0 0.0
    %594 = vmatpush1.msra.mxu0 0.0
    %595 = vmatprep.subr.mxu0 0.0
    %596 = vmatpush1.msra.mxu0 0.0
    %597 = vmatprep.subr.mxu0 0.0
    %598 = vmatpush1.msra.mxu0 0.0
    %599 = vmatprep.subr.mxu0 0.0
    %600 = vmatpush1.msra.mxu0 0.0
    %601 = vmatprep.subr.mxu0 0.0
    %602 = vmatpush1.msra.mxu0 0.0
    %603 = vmatprep.subr.mxu0 0.0
    %604 = vmatpush1.msra.mxu0 0.0
    %605 = vmatprep.subr.mxu0 0.0
    %606 = vmatpush1.msra.mxu0 0.0
    %607 = vmatprep.subr.mxu0 0.0
    %608 = vmatpush1.msra.mxu0 0.0
    %609 = vmatprep.subr.mxu0 0.0
    %610 = vmatpush1.msra.mxu0 0.0
    %611 = vmatprep.subr.mxu0 0.0
    %612 = vmatpush1.msra.mxu0 0.0
    %613 = vmatprep.subr.mxu0 0.0
    %614 = vmatpush1.msra.mxu0 0.0
    %615 = vmatprep.subr.mxu0 0.0
    %616 = vmatpush1.msra.mxu0 0.0
    %617 = vmatprep.subr.mxu0 0.0
    %618 = vmatpush1.msra.mxu0 0.0
    %619 = vmatprep.subr.mxu0 0.0
    %620 = vmatpush1.msra.mxu0 0.0
    %621 = vmatprep.subr.mxu0 0.0
    %622 = vmatpush1.msra.mxu0 0.0
    %623 = vmatprep.subr.mxu0 0.0
    %624 = vmatpush1.msra.mxu0 0.0
    %625 = vmatprep.subr.mxu0 0.0
    %626 = vmatpush1.msra.mxu0 0.0
    %627 = vmatprep.subr.mxu0 0.0
    %628 = vmatpush1.msra.mxu0 0.0
    %629 = vmatprep.subr.mxu0 0.0
    %630 = vmatpush1.msra.mxu0 0.0
    %631 = vmatprep.subr.mxu0 0.0
    %632 = vmatpush1.msra.mxu0 0.0
    %633 = vmatprep.mubr.f32.mxu0 0.0
    %634 = vmatmul.mubr.f32.gmra.mrb[0].mxu0 %v564
    %v635 = vpop.f32.mrb[0].mxu0
    %v636 = vadd.f32 %v561, %v635
    %v637 = vpop.f32.mrb[0].mxu0
    %638 = vmatprep.mubr.f32.mxu0 0.0
    %639 = vmatmul.mubr.f32.gmra.mrb[0].mxu0 %v567
    %v640 = vpop.f32.mrb[0].mxu0
    %v641 = vadd.f32 %v561, %v640
    %v642 = vpop.f32.mrb[0].mxu0
    %643 = vdwg.mxu0
    %v644 = vmax.f32 %v636, 0.0
    %v645 = vmax.f32 %v641, 0.0
    %v646 = vld [vmem:[%s15] sm:$0xff]
    %v647 = vld [vmem:[%s15 + $0x8] sm:$0xff]
    %v648 = vld [vmem:[%s15 + $0x10] sm:$0xff]
    %v649 = vld [vmem:[%s15 + $0x18] sm:$0xff]
    %v650 = vld [vmem:[%s15 + $0x20] sm:$0xff]
    %v651 = vld [vmem:[%s16] sm:$0x1]
    %v653 = vlaneseq
    %v654 = vshrl.u32 %v653, 7
    %v655 = vsub.s32 0, %v654
    %v656 = vrot.slane %v651, %v655
    %v659 = vsel %vm215, %v644, 0
    %v662 = vsel %vm215, %v645, 0
    %664 = vmatprep.subr.mxu0 0.0
    %665 = vmatpush1.msra.mxu0 %v646
    %666 = vmatprep.subr.mxu0 0.0
    %667 = vmatpush1.msra.mxu0 %v647
    %668 = vmatprep.subr.mxu0 0.0
    %669 = vmatpush1.msra.mxu0 %v648
    %670 = vmatprep.subr.mxu0 0.0
    %671 = vmatpush1.msra.mxu0 %v649
    %672 = vmatprep.subr.mxu0 0.0
    %673 = vmatpush1.msra.mxu0 %v650
    %674 = vmatprep.subr.mxu0 0.0
    %675 = vmatpush1.msra.mxu0 0.0
    %676 = vmatprep.subr.mxu0 0.0
    %677 = vmatpush1.msra.mxu0 0.0
    %678 = vmatprep.subr.mxu0 0.0
    %679 = vmatpush1.msra.mxu0 0.0
    %680 = vmatprep.subr.mxu0 0.0
    %681 = vmatpush1.msra.mxu0 0.0
    %682 = vmatprep.subr.mxu0 0.0
    %683 = vmatpush1.msra.mxu0 0.0
    %684 = vmatprep.subr.mxu0 0.0
    %685 = vmatpush1.msra.mxu0 0.0
    %686 = vmatprep.subr.mxu0 0.0
    %687 = vmatpush1.msra.mxu0 0.0
    %688 = vmatprep.subr.mxu0 0.0
    %689 = vmatpush1.msra.mxu0 0.0
    %690 = vmatprep.subr.mxu0 0.0
    %691 = vmatpush1.msra.mxu0 0.0
    %692 = vmatprep.subr.mxu0 0.0
    %693 = vmatpush1.msra.mxu0 0.0
    %694 = vmatprep.subr.mxu0 0.0
    %695 = vmatpush1.msra.mxu0 0.0
    %696 = vmatprep.subr.mxu0 0.0
    %697 = vmatpush1.msra.mxu0 0.0
    %698 = vmatprep.subr.mxu0 0.0
    %699 = vmatpush1.msra.mxu0 0.0
    %700 = vmatprep.subr.mxu0 0.0
    %701 = vmatpush1.msra.mxu0 0.0
    %702 = vmatprep.subr.mxu0 0.0
    %703 = vmatpush1.msra.mxu0 0.0
    %704 = vmatprep.subr.mxu0 0.0
    %705 = vmatpush1.msra.mxu0 0.0
    %706 = vmatprep.subr.mxu0 0.0
    %707 = vmatpush1.msra.mxu0 0.0
    %708 = vmatprep.subr.mxu0 0.0
    %709 = vmatpush1.msra.mxu0 0.0
    %710 = vmatprep.subr.mxu0 0.0
    %711 = vmatpush1.msra.mxu0 0.0
    %712 = vmatprep.subr.mxu0 0.0
    %713 = vmatpush1.msra.mxu0 0.0
    %714 = vmatprep.subr.mxu0 0.0
    %715 = vmatpush1.msra.mxu0 0.0
    %716 = vmatprep.subr.mxu0 0.0
    %717 = vmatpush1.msra.mxu0 0.0
    %718 = vmatprep.subr.mxu0 0.0
    %719 = vmatpush1.msra.mxu0 0.0
    %720 = vmatprep.subr.mxu0 0.0
    %721 = vmatpush1.msra.mxu0 0.0
    %722 = vmatprep.subr.mxu0 0.0
    %723 = vmatpush1.msra.mxu0 0.0
    %724 = vmatprep.subr.mxu0 0.0
    %725 = vmatpush1.msra.mxu0 0.0
    %726 = vmatprep.subr.mxu0 0.0
    %727 = vmatpush1.msra.mxu0 0.0
    %728 = vmatprep.mubr.f32.mxu0 0.0
    %729 = vmatmul.mubr.f32.gmra.mrb[0].mxu0 %v659
    %v730 = vpop.f32.mrb[0].mxu0
    %v731 = vadd.f32 %v656, %v730
    %v732 = vpop.f32.mrb[0].mxu0
    %733 = vmatprep.mubr.f32.mxu0 0.0
    %734 = vmatmul.mubr.f32.gmra.mrb[0].mxu0 %v662
    %v735 = vpop.f32.mrb[0].mxu0
    %v736 = vadd.f32 %v656, %v735
    %v737 = vpop.f32.mrb[0].mxu0
    %738 = vdwg.mxu0
    %v739 = vmax.f32 %v731, 0.0
    %v740 = vmax.f32 %v736, 0.0
    %v741 = vld [vmem:[%s17] sm:$0xff]
    %v742 = vld [vmem:[%s17 + $0x8] sm:$0xff]
    %v743 = vld [vmem:[%s17 + $0x10] sm:$0xff]
    %v744 = vld [vmem:[%s17 + $0x18] sm:$0xff]
    %v745 = vld [vmem:[%s17 + $0x20] sm:$0xff]
    %v746 = vld [vmem:[#allocation3] sm:$0x1]
    %v748 = vlaneseq
    %v749 = vshrl.u32 %v748, 7
    %v750 = vsub.s32 0, %v749
    %v751 = vrot.slane %v746, %v750
    %v754 = vsel %vm215, %v739, 0
    %v757 = vsel %vm215, %v740, 0
    %759 = vmatprep.subr.mxu0 0.0
    %760 = vmatpush1.msra.mxu0 %v741
    %761 = vmatprep.subr.mxu0 0.0
    %762 = vmatpush1.msra.mxu0 %v742
    %763 = vmatprep.subr.mxu0 0.0
    %764 = vmatpush1.msra.mxu0 %v743
    %765 = vmatprep.subr.mxu0 0.0
    %766 = vmatpush1.msra.mxu0 %v744
    %767 = vmatprep.subr.mxu0 0.0
    %768 = vmatpush1.msra.mxu0 %v745
    %769 = vmatprep.subr.mxu0 0.0
    %770 = vmatpush1.msra.mxu0 0.0
    %771 = vmatprep.subr.mxu0 0.0
    %772 = vmatpush1.msra.mxu0 0.0
    %773 = vmatprep.subr.mxu0 0.0
    %774 = vmatpush1.msra.mxu0 0.0
    %775 = vmatprep.subr.mxu0 0.0
    %776 = vmatpush1.msra.mxu0 0.0
    %777 = vmatprep.subr.mxu0 0.0
    %778 = vmatpush1.msra.mxu0 0.0
    %779 = vmatprep.subr.mxu0 0.0
    %780 = vmatpush1.msra.mxu0 0.0
    %781 = vmatprep.subr.mxu0 0.0
    %782 = vmatpush1.msra.mxu0 0.0
    %783 = vmatprep.subr.mxu0 0.0
    %784 = vmatpush1.msra.mxu0 0.0
    %785 = vmatprep.subr.mxu0 0.0
    %786 = vmatpush1.msra.mxu0 0.0
    %787 = vmatprep.subr.mxu0 0.0
    %788 = vmatpush1.msra.mxu0 0.0
    %789 = vmatprep.subr.mxu0 0.0
    %790 = vmatpush1.msra.mxu0 0.0
    %791 = vmatprep.subr.mxu0 0.0
    %792 = vmatpush1.msra.mxu0 0.0
    %793 = vmatprep.subr.mxu0 0.0
    %794 = vmatpush1.msra.mxu0 0.0
    %795 = vmatprep.subr.mxu0 0.0
    %796 = vmatpush1.msra.mxu0 0.0
    %797 = vmatprep.subr.mxu0 0.0
    %798 = vmatpush1.msra.mxu0 0.0
    %799 = vmatprep.subr.mxu0 0.0
    %800 = vmatpush1.msra.mxu0 0.0
    %801 = vmatprep.subr.mxu0 0.0
    %802 = vmatpush1.msra.mxu0 0.0
    %803 = vmatprep.subr.mxu0 0.0
    %804 = vmatpush1.msra.mxu0 0.0
    %805 = vmatprep.subr.mxu0 0.0
    %806 = vmatpush1.msra.mxu0 0.0
    %807 = vmatprep.subr.mxu0 0.0
    %808 = vmatpush1.msra.mxu0 0.0
    %809 = vmatprep.subr.mxu0 0.0
    %810 = vmatpush1.msra.mxu0 0.0
    %811 = vmatprep.subr.mxu0 0.0
    %812 = vmatpush1.msra.mxu0 0.0
    %813 = vmatprep.subr.mxu0 0.0
    %814 = vmatpush1.msra.mxu0 0.0
    %815 = vmatprep.subr.mxu0 0.0
    %816 = vmatpush1.msra.mxu0 0.0
    %817 = vmatprep.subr.mxu0 0.0
    %818 = vmatpush1.msra.mxu0 0.0
    %819 = vmatprep.subr.mxu0 0.0
    %820 = vmatpush1.msra.mxu0 0.0
    %821 = vmatprep.subr.mxu0 0.0
    %822 = vmatpush1.msra.mxu0 0.0
    %823 = vmatprep.mubr.f32.mxu0 0.0
    %824 = vmatmul.mubr.f32.gmra.mrb[0].mxu0 %v754
    %v825 = vpop.f32.mrb[0].mxu0
    %v826 = vadd.f32 %v751, %v825
    %v827 = vpop.f32.mrb[0].mxu0
    %828 = vmatprep.mubr.f32.mxu0 0.0
    %829 = vmatmul.mubr.f32.gmra.mrb[0].mxu0 %v757
    %v830 = vpop.f32.mrb[0].mxu0
    %v831 = vadd.f32 %v751, %v830
    %v832 = vpop.f32.mrb[0].mxu0
    %833 = vdwg.mxu0
    %v834 = vld [vmem:[%s2] sm:$0xff]
    %v835 = vld [vmem:[%s2 + $0x8] sm:$0x3]
    %v836 = vmul.f32 %v826, %v834
    %v837 = vmul.f32 %v831, %v835
    %vm838 = vcmask 7168
    %v839 = vsel %vm838, %v836, 0.0
    %vm840 = vcmask 1024
    %v841 = vsel %vm840, %v837, 0.0
    %v842 = vadd.f32 %v839, %v841
    %843 = vadd.xlane.f32.xlu0 %v842
    %v844 = vpop.xlane.xlu0 %843
    %v845 = vrot.slane %v844, 4
    %v846 = vadd.f32 %v844, %v845
    %v847 = vrot.slane %v846, 2
    %v848 = vadd.f32 %v846, %v847
    %v849 = vrot.slane %v848, 1
    %v850 = vadd.f32 %v848, %v849
    %s851 = vtos %v850
    %v852 = vstv %s851
    %v853 = vadd.f32 %v450, %v852
    %vm854 = vcmask 0
    %855 = vst.msk [vmem:[#allocation13] sm:$0x1] %vm854, %v853
    // Predicated region
    $region98: #{tpu_custom_call.1} parent=1 // pred_check
      _
    $region99: #{tpu_custom_call.1} parent=1 // pred_check_branch
      %857 = sbr.rel (0) target = $region101
    $region100: #{tpu_custom_call.1} parent=1 // pred_region
      %s859 = ssub.s32 16, 16
      %860 = vsyncadd [#allocation6], %s859
      %s862 = sshll.u32 [#allocation13], 4
      %s863 = int_to_ptr.vmem [resolvable:$true] %s862
      %865 = dma.vmem_to_hbm [thread:$0]  %s863, 16, %s19, [#allocation6]
    $region101: #{tpu_custom_call.1} parent=1 // pred_fallthru
      _
    // Predicated region
    $region102: #{tpu_custom_call.1} parent=1 // pred_check
      _
    $region103: #{tpu_custom_call.1} parent=1 // pred_check_branch
      %867 = sbr.rel (0) target = $region105
    $region104: #{tpu_custom_call.1} parent=1 // pred_region
      %868 = dma.done [#allocation6], 16
    $region105: #{tpu_custom_call.1} parent=1 // pred_fallthru
      _
    %869 = vsyncpa [#allocation5], 1
    %870 = vsyncpa [#allocation8], 1
    %871 = vsyncpa [#allocation11], 1
    %872 = vsyncpa [#allocation6], 1

</llo_original>
